<compile_context>
chip_gen: v7x
topology: tpu7x:2x2x1
jax: 0.10.0
libtpu: 0.0.40
codegen_flags: <defaults>
</compile_context>

<pallas_src>
import functools

import jax
import jax.numpy as jnp
from jax import lax
from jax.experimental import pallas as pl
from jax.experimental.pallas import tpu as pltpu

# murmur3 fmix32 / golden-ratio constants as wrapped int32 literals.
_C1 = -2048144789    # 0x85ebca6b
_C2 = -1028477387    # 0xc2b2ae35
_GOLD = -1640531527  # 0x9e3779b9

_SQRT2 = 1.4142135623730951
_WINITZKI_A = 0.147
_WINITZKI_C = 2.0 / (3.141592653589793 * _WINITZKI_A)  # 2 / (pi * a)
_INV_A = 1.0 / _WINITZKI_A


def _lsr(v, k):
    # Logical shift right on int32: arithmetic shift, then mask off sign-extended bits.
    return jnp.right_shift(v, k) & ((1 << (32 - k)) - 1)


def _gaussian_noise_kernel(seed_ref, x_ref, o_ref, *, loc, scale, width, tile_rows):
    # Global element index of every lane in this tile -> noise independent of tiling.
    row_ids = lax.broadcasted_iota(jnp.int32, x_ref.shape, 0) + pl.program_id(0) * tile_rows
    col_ids = lax.broadcasted_iota(jnp.int32, x_ref.shape, 1)
    idx = row_ids * width + col_ids

    # Counter-based PRNG: Weyl step with the seed, then murmur3 fmix32 avalanche.
    h = idx * _GOLD + seed_ref[0]
    h = h ^ _lsr(h, 16)
    h = h * _C1
    h = h ^ _lsr(h, 13)
    h = h * _C2
    h = h ^ _lsr(h, 16)

    # 24 uniform bits -> u in (0, 1) -> y in (-1, 1).
    bits = _lsr(h, 8)
    u = (bits.astype(jnp.float32) + 0.5) * (1.0 / (1 << 24))
    y = 2.0 * u - 1.0

    # Standard normal: z = sqrt(2) * erfinv(y), Winitzki approximation (rel. err ~1e-4,
    # plenty for a noise-injection layer).  1 - y*y >= 2^-23 > 0 by construction.
    big_l = jnp.log(1.0 - y * y)
    t = _WINITZKI_C + 0.5 * big_l
    mag = jnp.sqrt(jnp.sqrt(t * t - big_l * _INV_A) - t)
    z = jnp.where(y < 0.0, -mag, mag)

    noise = z * (scale * _SQRT2)
    if loc != 0.0:                           # skip one full-vreg VALU op in the default case
        noise = noise + loc
    o_ref[...] = x_ref[...].astype(jnp.float32) + noise


def gaussian_noise(x, *, loc=0.0, scale=0.03, seed=0):
    """Pallas equivalent of GaussianNoise.forward: x + Normal(loc, scale), cast to float32."""
    orig_shape = x.shape
    n = x.size

    # Lane-dense 2-D view.  A reshape is layout-preserving (no HBM copy); zero-padding
    # (one extra copy) is only needed when numel is not a multiple of 128 (rare).
    width = next((w for w in (1024, 512, 256, 128) if n % w == 0), None)
    if width is None:
        width = 128
        pad = (-n) % width
        x_flat = jnp.concatenate([jnp.reshape(x, (-1,)), jnp.zeros((pad,), x.dtype)])
    else:
        x_flat = jnp.reshape(x, (-1,))
    rows = x_flat.size // width
    x2d = jnp.reshape(x_flat, (rows, width))

    # ~2 MiB of f32 per block -> 2 input + 2 output double-buffers ~= 8 MiB live VMEM:
    # inside the default scoped VMEM on v5e (16 MiB) and far under v6e/v7x limits.
    tile_rows = min(rows, max(8, (512 * 1024) // width))
    if tile_rows != rows:
        tile_rows = max(8, (tile_rows // 8) * 8)   # (8, 128) tiling rule
    grid = (pl.cdiv(rows, tile_rows),)             # ragged last block handled by Pallas

    seed_arr = jnp.asarray([seed], dtype=jnp.int32)
    kernel = functools.partial(
        _gaussian_noise_kernel,
        loc=float(loc), scale=float(scale), width=width, tile_rows=tile_rows)

    out2d = pl.pallas_call(
        kernel,
        out_shape=jax.ShapeDtypeStruct((rows, width), jnp.float32),
        grid=grid,
        in_specs=[
            pl.BlockSpec(memory_space=pltpu.MemorySpace.SMEM),       # seed scalar
            pl.BlockSpec((tile_rows, width), lambda i: (i, 0)),      # input tile (native dtype)
        ],
        out_specs=pl.BlockSpec((tile_rows, width), lambda i: (i, 0)),
        compiler_params=pltpu.CompilerParams(dimension_semantics=("parallel",)),
    )(seed_arr, x2d)

    out_flat = jnp.reshape(out2d, (-1,))
    if out_flat.size != n:
        out_flat = out_flat[:n]
    return jnp.reshape(out_flat, orig_shape)


if __name__ == "__main__":
    key = jax.random.PRNGKey(0)
    # Small NCHW input, consistent with the conv-style usage of this noise layer.
    x = jax.random.normal(key, (2, 4, 16, 16), dtype=jnp.float32)

    out = jax.block_until_ready(gaussian_noise(x, loc=0.0, scale=0.03, seed=0))

    assert out.shape == x.shape, (out.shape, x.shape)
    assert out.dtype == jnp.float32, out.dtype

    # Sanity: recovered noise is ~N(0, 1) after dividing by scale, and stays small.
    z = (out - x) / 0.03
    assert float(jnp.max(jnp.abs(out - x))) < 0.5, float(jnp.max(jnp.abs(out - x)))
    assert abs(float(jnp.mean(z))) < 0.2, float(jnp.mean(z))
    assert 0.85 < float(jnp.std(z)) < 1.15, float(jnp.std(z))

    print("KERNEL_OK")
</pallas_src>

<mosaic_0001>
module attributes {stable_mosaic.version = 11 : i64} {
  func.func @_gaussian_noise_kernel(%arg0: i32, %arg1: memref<1xi32, #tpu.memory_space<smem>>, %arg2: memref<2x1024xf32, #tpu.memory_space<vmem>>, %arg3: memref<2x1024xf32, #tpu.memory_space<vmem>>) attributes {dimension_semantics = [#tpu.dimension_semantics<parallel>], iteration_bounds = array<i64: 1>, scalar_prefetch = 0 : i64, scratch_operands = 0 : i64, tpu.core_type = #tpu.core_type<tc>, window_params = [{transform_indices = @transform_0, window_bounds = array<i64: 1>}, {transform_indices = @transform_1, window_bounds = array<i64: 2, 1024>}, {transform_indices = @transform_2, window_bounds = array<i64: 2, 1024>}]} {
    %0 = tpu.iota {dimensions = array<i32: 0>} : vector<2x1024xi32>
    %c2_i32 = arith.constant 2 : i32
    %1 = arith.muli %arg0, %c2_i32 : i32
    %2 = vector.broadcast %1 : i32 to vector<2x1024xi32>
    %3 = arith.addi %0, %2 : vector<2x1024xi32>
    %4 = tpu.iota {dimensions = array<i32: 1>} : vector<2x1024xi32>
    %c1024_i32 = arith.constant 1024 : i32
    %5 = vector.broadcast %c1024_i32 : i32 to vector<2x1024xi32>
    %6 = arith.muli %3, %5 : vector<2x1024xi32>
    %7 = arith.addi %6, %4 : vector<2x1024xi32>
    %c-1640531527_i32 = arith.constant -1640531527 : i32
    %8 = vector.broadcast %c-1640531527_i32 : i32 to vector<2x1024xi32>
    %9 = arith.muli %7, %8 : vector<2x1024xi32>
    %c0 = arith.constant 0 : index
    %10 = memref.load %arg1[%c0] : memref<1xi32, #tpu.memory_space<smem>>
    %11 = vector.broadcast %10 : i32 to vector<2x1024xi32>
    %12 = arith.addi %9, %11 : vector<2x1024xi32>
    %c16_i32 = arith.constant 16 : i32
    %13 = vector.broadcast %c16_i32 : i32 to vector<2x1024xi32>
    %14 = arith.shrsi %12, %13 : vector<2x1024xi32>
    %c65535_i32 = arith.constant 65535 : i32
    %15 = vector.broadcast %c65535_i32 : i32 to vector<2x1024xi32>
    %16 = arith.andi %14, %15 : vector<2x1024xi32>
    %17 = arith.xori %12, %16 : vector<2x1024xi32>
    %c-2048144789_i32 = arith.constant -2048144789 : i32
    %18 = vector.broadcast %c-2048144789_i32 : i32 to vector<2x1024xi32>
    %19 = arith.muli %17, %18 : vector<2x1024xi32>
    %c13_i32 = arith.constant 13 : i32
    %20 = vector.broadcast %c13_i32 : i32 to vector<2x1024xi32>
    %21 = arith.shrsi %19, %20 : vector<2x1024xi32>
    %c524287_i32 = arith.constant 524287 : i32
    %22 = vector.broadcast %c524287_i32 : i32 to vector<2x1024xi32>
    %23 = arith.andi %21, %22 : vector<2x1024xi32>
    %24 = arith.xori %19, %23 : vector<2x1024xi32>
    %c-1028477387_i32 = arith.constant -1028477387 : i32
    %25 = vector.broadcast %c-1028477387_i32 : i32 to vector<2x1024xi32>
    %26 = arith.muli %24, %25 : vector<2x1024xi32>
    %c16_i32_0 = arith.constant 16 : i32
    %27 = vector.broadcast %c16_i32_0 : i32 to vector<2x1024xi32>
    %28 = arith.shrsi %26, %27 : vector<2x1024xi32>
    %c65535_i32_1 = arith.constant 65535 : i32
    %29 = vector.broadcast %c65535_i32_1 : i32 to vector<2x1024xi32>
    %30 = arith.andi %28, %29 : vector<2x1024xi32>
    %31 = arith.xori %26, %30 : vector<2x1024xi32>
    %c8_i32 = arith.constant 8 : i32
    %32 = vector.broadcast %c8_i32 : i32 to vector<2x1024xi32>
    %33 = arith.shrsi %31, %32 : vector<2x1024xi32>
    %c16777215_i32 = arith.constant 16777215 : i32
    %34 = vector.broadcast %c16777215_i32 : i32 to vector<2x1024xi32>
    %35 = arith.andi %33, %34 : vector<2x1024xi32>
    %36 = arith.sitofp %35 : vector<2x1024xi32> to vector<2x1024xf32>
    %cst = arith.constant 5.000000e-01 : f32
    %37 = vector.broadcast %cst : f32 to vector<2x1024xf32>
    %38 = arith.addf %36, %37 : vector<2x1024xf32>
    %cst_2 = arith.constant 5.96046448E-8 : f32
    %39 = vector.broadcast %cst_2 : f32 to vector<2x1024xf32>
    %40 = arith.mulf %38, %39 : vector<2x1024xf32>
    %cst_3 = arith.constant 2.000000e+00 : f32
    %41 = vector.broadcast %cst_3 : f32 to vector<2x1024xf32>
    %42 = arith.mulf %41, %40 : vector<2x1024xf32>
    %cst_4 = arith.constant 1.000000e+00 : f32
    %43 = vector.broadcast %cst_4 : f32 to vector<2x1024xf32>
    %44 = arith.subf %42, %43 : vector<2x1024xf32>
    %45 = arith.mulf %44, %44 : vector<2x1024xf32>
    %cst_5 = arith.constant 1.000000e+00 : f32
    %46 = vector.broadcast %cst_5 : f32 to vector<2x1024xf32>
    %47 = arith.subf %46, %45 : vector<2x1024xf32>
    %48 = math.log %47 : vector<2x1024xf32>
    %cst_6 = arith.constant 5.000000e-01 : f32
    %49 = vector.broadcast %cst_6 : f32 to vector<2x1024xf32>
    %50 = arith.mulf %49, %48 : vector<2x1024xf32>
    %cst_7 = arith.constant 4.33074665 : f32
    %51 = vector.broadcast %cst_7 : f32 to vector<2x1024xf32>
    %52 = arith.addf %51, %50 : vector<2x1024xf32>
    %53 = arith.mulf %52, %52 : vector<2x1024xf32>
    %cst_8 = arith.constant 6.80272102 : f32
    %54 = vector.broadcast %cst_8 : f32 to vector<2x1024xf32>
    %55 = arith.mulf %48, %54 : vector<2x1024xf32>
    %56 = arith.subf %53, %55 : vector<2x1024xf32>
    %57 = math.sqrt %56 : vector<2x1024xf32>
    %58 = arith.subf %57, %52 : vector<2x1024xf32>
    %59 = math.sqrt %58 : vector<2x1024xf32>
    %cst_9 = arith.constant 0.000000e+00 : f32
    %60 = vector.broadcast %cst_9 : f32 to vector<2x1024xf32>
    %61 = arith.cmpf olt, %44, %60 : vector<2x1024xf32>
    %cst_10 = arith.constant 0.000000e+00 : f32
    %62 = vector.broadcast %cst_10 : f32 to vector<2x1024xf32>
    %63 = arith.subf %62, %59 : vector<2x1024xf32>
    %64 = arith.select %61, %63, %59 : vector<2x1024xi1>, vector<2x1024xf32>
    %cst_11 = arith.constant 0.0424264073 : f32
    %65 = vector.broadcast %cst_11 : f32 to vector<2x1024xf32>
    %66 = arith.mulf %64, %65 : vector<2x1024xf32>
    %c0_12 = arith.constant 0 : index
    %c0_13 = arith.constant 0 : index
    %67 = vector.load %arg2[%c0_12, %c0_13] : memref<2x1024xf32, #tpu.memory_space<vmem>>, vector<2x1024xf32>
    %68 = arith.addf %67, %66 : vector<2x1024xf32>
    %c0_14 = arith.constant 0 : index
    %c0_15 = arith.constant 0 : index
    %69 = vector.load %arg3[%c0_14, %c0_15] : memref<2x1024xf32, #tpu.memory_space<vmem>>, vector<2x1024xf32>
    tpu.vector_store %arg3[%c0_14, %c0_15], %68 {strides = array<i32>} : memref<2x1024xf32, #tpu.memory_space<vmem>>, vector<2x1024xf32>,
    return
  }
  func.func @transform_0(%arg0: i32) -> i32 {
    %c0_i32 = arith.constant 0 : i32
    %c0_i32_0 = arith.constant 0 : i32
    return %c0_i32 : i32
  }
  func.func @transform_1(%arg0: i32) -> (i32, i32) {
    %c0_i32 = arith.constant 0 : i32
    %c0_i32_0 = arith.constant 0 : i32
    return %arg0, %c0_i32 : i32, i32
  }
  func.func @transform_2(%arg0: i32) -> (i32, i32) {
    %c0_i32 = arith.constant 0 : i32
    %c0_i32_0 = arith.constant 0 : i32
    return %arg0, %c0_i32 : i32, i32
  }
}

</mosaic_0001>

<llo_original>
// kernel: tpu_custom_call.1
$region0: #{tpu_custom_call.1}
  #allocation0 [shape = 'u32[]', space=smem, size = 0x4, offset = 0x4, fixed_abs, tag = 'smem constant byte address 0x4 - core index']
  #allocation1 [shape = 'u32[144,128]{1,0:T(1,128)}', space=vmem, size = 0x12000, scoped, tag = 'internal scratch']
  #allocation2 [shape = 's32[1]{0:T(128)S(6)}', space=smem, size = 0x200, scoped, tag = 'scoped memory for tpu_custom_call.1']
  %s0 = inlined_call_operand.<no memory space> [shape: s32[1], index: 0, kind: input, shape index: {}]
  %s1 = inlined_call_operand.hbm [shape: f32[2,1024], index: 1, kind: input, shape index: {}]
  %s2 = inlined_call_operand.hbm [shape: f32[2,1024], index: 2, kind: output, shape index: {}]
  %s3 = sld [smem:[#allocation0]]
  $region22: #{tpu_custom_call.1} parent=0
    _
  %s5 = ssub.s32 1, %s3
  %s6 = scalar_select 0, %s5, %s3
  %7 = sst [smem:[#allocation2]] %s0
  $region1: #{tpu_custom_call.1} parent=0
    #allocation3 [shape = 'u8[8192]{0}', space=vmem, size = 0x2000, scoped, tag = 'input window, operand 1, single buffered']
    #allocation4 [shape = 's32[1]{0}', space=sflag, size = 0x4, scoped, tag = 'scoped memory for tpu_custom_call.1']
    #allocation5 [shape = 's32[1]{0}', space=sflag, size = 0x4, scoped, tag = 'scoped memory for tpu_custom_call.1']
    #allocation6 [shape = 'u8[8192]{0}', space=vmem, size = 0x2000, scoped, tag = 'output window, operand 0, single buffered']
    %8 = vsyncpa [#allocation4], 0
    %9 = vsyncpa [#allocation5], 0
    // Predicated region
    $region2: #{tpu_custom_call.1} parent=1 // pred_check
      _
    $region3: #{tpu_custom_call.1} parent=1 // pred_check_branch
      %11 = sbr.rel (0) target = $region5
    $region4: #{tpu_custom_call.1} parent=1 // pred_region
      _
    $region5: #{tpu_custom_call.1} parent=1 // pred_fallthru
      _
    // Predicated region
    $region6: #{tpu_custom_call.1} parent=1 // pred_check
      _
    $region7: #{tpu_custom_call.1} parent=1 // pred_check_branch
      %13 = sbr.rel (0) target = $region9
    $region8: #{tpu_custom_call.1} parent=1 // pred_region
      %s15 = ssub.s32 256, 256
      %16 = vsyncadd [#allocation4], %s15
      %s18 = sshll.u32 [#allocation3], 4
      %s19 = int_to_ptr.vmem [resolvable:$true] %s18
      %21 = dma.hbm_to_vmem [thread:$0]  %s1, 256, %s19, [#allocation4]
    $region9: #{tpu_custom_call.1} parent=1 // pred_fallthru
      _
    // Predicated region
    $region10: #{tpu_custom_call.1} parent=1 // pred_check
      _
    $region11: #{tpu_custom_call.1} parent=1 // pred_check_branch
      %23 = sbr.rel (0) target = $region13
    $region12: #{tpu_custom_call.1} parent=1 // pred_region
      %24 = dma.done [#allocation4], 256
    $region13: #{tpu_custom_call.1} parent=1 // pred_fallthru
      _
    %v25 = vlaneseq
    %v26 = vshrl.u32 %v25, 7
    %s27 = smul.u32 0, 2
    %v28 = vstv %s27
    %v29 = vadd.s32 %v26, %v28
    %v30 = vlaneseq
    %v31 = vand.u32 %v30, 127
    %v32 = vadd.s32 %v31, 128
    %v33 = vadd.s32 %v31, 256
    %v34 = vadd.s32 %v31, 384
    %v35 = vadd.s32 %v31, 512
    %v36 = vadd.s32 %v31, 640
    %v37 = vadd.s32 %v31, 768
    %v38 = vadd.s32 %v31, 896
    %v39 = vmul.u32 %v29, 1024
    %v40 = vadd.s32 %v39, %v31
    %v41 = vadd.s32 %v39, %v32
    %v42 = vadd.s32 %v39, %v33
    %v43 = vadd.s32 %v39, %v34
    %v44 = vadd.s32 %v39, %v35
    %v45 = vadd.s32 %v39, %v36
    %v46 = vadd.s32 %v39, %v37
    %v47 = vadd.s32 %v39, %v38
    %v48 = vmul.u32 %v40, 2654435769
    %v49 = vmul.u32 %v41, 2654435769
    %v50 = vmul.u32 %v42, 2654435769
    %v51 = vmul.u32 %v43, 2654435769
    %v52 = vmul.u32 %v44, 2654435769
    %v53 = vmul.u32 %v45, 2654435769
    %v54 = vmul.u32 %v46, 2654435769
    %v55 = vmul.u32 %v47, 2654435769
    %s56 = sld [smem:[#allocation2]]
    %v57 = vstv %s56
    %v58 = vadd.s32 %v48, %v57
    %v59 = vadd.s32 %v49, %v57
    %v60 = vadd.s32 %v50, %v57
    %v61 = vadd.s32 %v51, %v57
    %v62 = vadd.s32 %v52, %v57
    %v63 = vadd.s32 %v53, %v57
    %v64 = vadd.s32 %v54, %v57
    %v65 = vadd.s32 %v55, %v57
    %v66 = vshra.s32 %v58, 16
    %v67 = vshra.s32 %v59, 16
    %v68 = vshra.s32 %v60, 16
    %v69 = vshra.s32 %v61, 16
    %v70 = vshra.s32 %v62, 16
    %v71 = vshra.s32 %v63, 16
    %v72 = vshra.s32 %v64, 16
    %v73 = vshra.s32 %v65, 16
    %v74 = vand.u32 %v66, 65535
    %v75 = vand.u32 %v67, 65535
    %v76 = vand.u32 %v68, 65535
    %v77 = vand.u32 %v69, 65535
    %v78 = vand.u32 %v70, 65535
    %v79 = vand.u32 %v71, 65535
    %v80 = vand.u32 %v72, 65535
    %v81 = vand.u32 %v73, 65535
    %v82 = vxor.u32 %v58, %v74
    %v83 = vxor.u32 %v59, %v75
    %v84 = vxor.u32 %v60, %v76
    %v85 = vxor.u32 %v61, %v77
    %v86 = vxor.u32 %v62, %v78
    %v87 = vxor.u32 %v63, %v79
    %v88 = vxor.u32 %v64, %v80
    %v89 = vxor.u32 %v65, %v81
    %v90 = vmul.u32 %v82, 2246822507
    %v91 = vmul.u32 %v83, 2246822507
    %v92 = vmul.u32 %v84, 2246822507
    %v93 = vmul.u32 %v85, 2246822507
    %v94 = vmul.u32 %v86, 2246822507
    %v95 = vmul.u32 %v87, 2246822507
    %v96 = vmul.u32 %v88, 2246822507
    %v97 = vmul.u32 %v89, 2246822507
    %v98 = vshra.s32 %v90, 13
    %v99 = vshra.s32 %v91, 13
    %v100 = vshra.s32 %v92, 13
    %v101 = vshra.s32 %v93, 13
    %v102 = vshra.s32 %v94, 13
    %v103 = vshra.s32 %v95, 13
    %v104 = vshra.s32 %v96, 13
    %v105 = vshra.s32 %v97, 13
    %v106 = vand.u32 %v98, 524287
    %v107 = vand.u32 %v99, 524287
    %v108 = vand.u32 %v100, 524287
    %v109 = vand.u32 %v101, 524287
    %v110 = vand.u32 %v102, 524287
    %v111 = vand.u32 %v103, 524287
    %v112 = vand.u32 %v104, 524287
    %v113 = vand.u32 %v105, 524287
    %v114 = vxor.u32 %v90, %v106
    %v115 = vxor.u32 %v91, %v107
    %v116 = vxor.u32 %v92, %v108
    %v117 = vxor.u32 %v93, %v109
    %v118 = vxor.u32 %v94, %v110
    %v119 = vxor.u32 %v95, %v111
    %v120 = vxor.u32 %v96, %v112
    %v121 = vxor.u32 %v97, %v113
    %v122 = vmul.u32 %v114, 3266489909
    %v123 = vmul.u32 %v115, 3266489909
    %v124 = vmul.u32 %v116, 3266489909
    %v125 = vmul.u32 %v117, 3266489909
    %v126 = vmul.u32 %v118, 3266489909
    %v127 = vmul.u32 %v119, 3266489909
    %v128 = vmul.u32 %v120, 3266489909
    %v129 = vmul.u32 %v121, 3266489909
    %v130 = vshra.s32 %v122, 16
    %v131 = vshra.s32 %v123, 16
    %v132 = vshra.s32 %v124, 16
    %v133 = vshra.s32 %v125, 16
    %v134 = vshra.s32 %v126, 16
    %v135 = vshra.s32 %v127, 16
    %v136 = vshra.s32 %v128, 16
    %v137 = vshra.s32 %v129, 16
    %v138 = vand.u32 %v130, 65535
    %v139 = vand.u32 %v131, 65535
    %v140 = vand.u32 %v132, 65535
    %v141 = vand.u32 %v133, 65535
    %v142 = vand.u32 %v134, 65535
    %v143 = vand.u32 %v135, 65535
    %v144 = vand.u32 %v136, 65535
    %v145 = vand.u32 %v137, 65535
    %v146 = vxor.u32 %v122, %v138
    %v147 = vxor.u32 %v123, %v139
    %v148 = vxor.u32 %v124, %v140
    %v149 = vxor.u32 %v125, %v141
    %v150 = vxor.u32 %v126, %v142
    %v151 = vxor.u32 %v127, %v143
    %v152 = vxor.u32 %v128, %v144
    %v153 = vxor.u32 %v129, %v145
    %v154 = vshra.s32 %v146, 8
    %v155 = vshra.s32 %v147, 8
    %v156 = vshra.s32 %v148, 8
    %v157 = vshra.s32 %v149, 8
    %v158 = vshra.s32 %v150, 8
    %v159 = vshra.s32 %v151, 8
    %v160 = vshra.s32 %v152, 8
    %v161 = vshra.s32 %v153, 8
    %v162 = vand.u32 %v154, 16777215
    %v163 = vand.u32 %v155, 16777215
    %v164 = vand.u32 %v156, 16777215
    %v165 = vand.u32 %v157, 16777215
    %v166 = vand.u32 %v158, 16777215
    %v167 = vand.u32 %v159, 16777215
    %v168 = vand.u32 %v160, 16777215
    %v169 = vand.u32 %v161, 16777215
    %v170 = vcvt.s32.f32 %v162
    %v171 = vcvt.s32.f32 %v163
    %v172 = vcvt.s32.f32 %v164
    %v173 = vcvt.s32.f32 %v165
    %v174 = vcvt.s32.f32 %v166
    %v175 = vcvt.s32.f32 %v167
    %v176 = vcvt.s32.f32 %v168
    %v177 = vcvt.s32.f32 %v169
    %v178 = vadd.f32 %v170, 0.5
    %v179 = vadd.f32 %v171, 0.5
    %v180 = vadd.f32 %v172, 0.5
    %v181 = vadd.f32 %v173, 0.5
    %v182 = vadd.f32 %v174, 0.5
    %v183 = vadd.f32 %v175, 0.5
    %v184 = vadd.f32 %v176, 0.5
    %v185 = vadd.f32 %v177, 0.5
    %v186 = vmul.f32 %v178, 5.9604645e-08
    %v187 = vmul.f32 %v179, 5.9604645e-08
    %v188 = vmul.f32 %v180, 5.9604645e-08
    %v189 = vmul.f32 %v181, 5.9604645e-08
    %v190 = vmul.f32 %v182, 5.9604645e-08
    %v191 = vmul.f32 %v183, 5.9604645e-08
    %v192 = vmul.f32 %v184, 5.9604645e-08
    %v193 = vmul.f32 %v185, 5.9604645e-08
    %v194 = vmul.f32 %v186, 2.0
    %v195 = vmul.f32 %v187, 2.0
    %v196 = vmul.f32 %v188, 2.0
    %v197 = vmul.f32 %v189, 2.0
    %v198 = vmul.f32 %v190, 2.0
    %v199 = vmul.f32 %v191, 2.0
    %v200 = vmul.f32 %v192, 2.0
    %v201 = vmul.f32 %v193, 2.0
    %v202 = vsub.f32 %v194, 1.0
    %v203 = vsub.f32 %v195, 1.0
    %v204 = vsub.f32 %v196, 1.0
    %v205 = vsub.f32 %v197, 1.0
    %v206 = vsub.f32 %v198, 1.0
    %v207 = vsub.f32 %v199, 1.0
    %v208 = vsub.f32 %v200, 1.0
    %v209 = vsub.f32 %v201, 1.0
    %v210 = vmul.f32 %v202, %v202
    %v211 = vmul.f32 %v203, %v203
    %v212 = vmul.f32 %v204, %v204
    %v213 = vmul.f32 %v205, %v205
    %v214 = vmul.f32 %v206, %v206
    %v215 = vmul.f32 %v207, %v207
    %v216 = vmul.f32 %v208, %v208
    %v217 = vmul.f32 %v209, %v209
    %v218 = vsub.f32 1.0, %v210
    %v219 = vsub.f32 1.0, %v211
    %v220 = vsub.f32 1.0, %v212
    %v221 = vsub.f32 1.0, %v213
    %v222 = vsub.f32 1.0, %v214
    %v223 = vsub.f32 1.0, %v215
    %v224 = vsub.f32 1.0, %v216
    %v225 = vsub.f32 1.0, %v217
    %v226 = vlog2.pop %v218
    %v227 = vmul.f32 %v226, 0.6931472
    %v228 = vlog2.pop %v219
    %v229 = vmul.f32 %v228, 0.6931472
    %v230 = vlog2.pop %v220
    %v231 = vmul.f32 %v230, 0.6931472
    %v232 = vlog2.pop %v221
    %v233 = vmul.f32 %v232, 0.6931472
    %v234 = vlog2.pop %v222
    %v235 = vmul.f32 %v234, 0.6931472
    %v236 = vlog2.pop %v223
    %v237 = vmul.f32 %v236, 0.6931472
    %v238 = vlog2.pop %v224
    %v239 = vmul.f32 %v238, 0.6931472
    %v240 = vlog2.pop %v225
    %v241 = vmul.f32 %v240, 0.6931472
    %v242 = vmul.f32 %v227, 0.5
    %v243 = vmul.f32 %v229, 0.5
    %v244 = vmul.f32 %v231, 0.5
    %v245 = vmul.f32 %v233, 0.5
    %v246 = vmul.f32 %v235, 0.5
    %v247 = vmul.f32 %v237, 0.5
    %v248 = vmul.f32 %v239, 0.5
    %v249 = vmul.f32 %v241, 0.5
    %v250 = vadd.f32 %v242, 4.3307467
    %v251 = vadd.f32 %v243, 4.3307467
    %v252 = vadd.f32 %v244, 4.3307467
    %v253 = vadd.f32 %v245, 4.3307467
    %v254 = vadd.f32 %v246, 4.3307467
    %v255 = vadd.f32 %v247, 4.3307467
    %v256 = vadd.f32 %v248, 4.3307467
    %v257 = vadd.f32 %v249, 4.3307467
    %v258 = vmul.f32 %v250, %v250
    %v259 = vmul.f32 %v251, %v251
    %v260 = vmul.f32 %v252, %v252
    %v261 = vmul.f32 %v253, %v253
    %v262 = vmul.f32 %v254, %v254
    %v263 = vmul.f32 %v255, %v255
    %v264 = vmul.f32 %v256, %v256
    %v265 = vmul.f32 %v257, %v257
    %v266 = vmul.f32 %v227, 6.802721
    %v267 = vmul.f32 %v229, 6.802721
    %v268 = vmul.f32 %v231, 6.802721
    %v269 = vmul.f32 %v233, 6.802721
    %v270 = vmul.f32 %v235, 6.802721
    %v271 = vmul.f32 %v237, 6.802721
    %v272 = vmul.f32 %v239, 6.802721
    %v273 = vmul.f32 %v241, 6.802721
    %v274 = vsub.f32 %v258, %v266
    %v275 = vsub.f32 %v259, %v267
    %v276 = vsub.f32 %v260, %v268
    %v277 = vsub.f32 %v261, %v269
    %v278 = vsub.f32 %v262, %v270
    %v279 = vsub.f32 %v263, %v271
    %v280 = vsub.f32 %v264, %v272
    %v281 = vsub.f32 %v265, %v273
    %v282 = vrsqrt.pop %v274
    %v283 = vmul.f32 %v274, %v282
    %vm284 = vcmp.eq.f32.partialorder %v274, inf
    %v285 = vsel %vm284, %v274, %v283
    %vm286 = vcmp.eq.f32.partialorder %v274, 0.0
    %v287 = vand.u32 %v274, 2147483648
    %v288 = vsel %vm286, %v287, %v285
    %v289 = vrsqrt.pop %v275
    %v290 = vmul.f32 %v275, %v289
    %vm291 = vcmp.eq.f32.partialorder %v275, inf
    %v292 = vsel %vm291, %v275, %v290
    %vm293 = vcmp.eq.f32.partialorder %v275, 0.0
    %v294 = vand.u32 %v275, 2147483648
    %v295 = vsel %vm293, %v294, %v292
    %v296 = vrsqrt.pop %v276
    %v297 = vmul.f32 %v276, %v296
    %vm298 = vcmp.eq.f32.partialorder %v276, inf
    %v299 = vsel %vm298, %v276, %v297
    %vm300 = vcmp.eq.f32.partialorder %v276, 0.0
    %v301 = vand.u32 %v276, 2147483648
    %v302 = vsel %vm300, %v301, %v299
    %v303 = vrsqrt.pop %v277
    %v304 = vmul.f32 %v277, %v303
    %vm305 = vcmp.eq.f32.partialorder %v277, inf
    %v306 = vsel %vm305, %v277, %v304
    %vm307 = vcmp.eq.f32.partialorder %v277, 0.0
    %v308 = vand.u32 %v277, 2147483648
    %v309 = vsel %vm307, %v308, %v306
    %v310 = vrsqrt.pop %v278
    %v311 = vmul.f32 %v278, %v310
    %vm312 = vcmp.eq.f32.partialorder %v278, inf
    %v313 = vsel %vm312, %v278, %v311
    %vm314 = vcmp.eq.f32.partialorder %v278, 0.0
    %v315 = vand.u32 %v278, 2147483648
    %v316 = vsel %vm314, %v315, %v313
    %v317 = vrsqrt.pop %v279
    %v318 = vmul.f32 %v279, %v317
    %vm319 = vcmp.eq.f32.partialorder %v279, inf
    %v320 = vsel %vm319, %v279, %v318
    %vm321 = vcmp.eq.f32.partialorder %v279, 0.0
    %v322 = vand.u32 %v279, 2147483648
    %v323 = vsel %vm321, %v322, %v320
    %v324 = vrsqrt.pop %v280
    %v325 = vmul.f32 %v280, %v324
    %vm326 = vcmp.eq.f32.partialorder %v280, inf
    %v327 = vsel %vm326, %v280, %v325
    %vm328 = vcmp.eq.f32.partialorder %v280, 0.0
    %v329 = vand.u32 %v280, 2147483648
    %v330 = vsel %vm328, %v329, %v327
    %v331 = vrsqrt.pop %v281
    %v332 = vmul.f32 %v281, %v331
    %vm333 = vcmp.eq.f32.partialorder %v281, inf
    %v334 = vsel %vm333, %v281, %v332
    %vm335 = vcmp.eq.f32.partialorder %v281, 0.0
    %v336 = vand.u32 %v281, 2147483648
    %v337 = vsel %vm335, %v336, %v334
    %v338 = vsub.f32 %v288, %v250
    %v339 = vsub.f32 %v295, %v251
    %v340 = vsub.f32 %v302, %v252
    %v341 = vsub.f32 %v309, %v253
    %v342 = vsub.f32 %v316, %v254
    %v343 = vsub.f32 %v323, %v255
    %v344 = vsub.f32 %v330, %v256
    %v345 = vsub.f32 %v337, %v257
    %v346 = vrsqrt.pop %v338
    %v347 = vmul.f32 %v338, %v346
    %vm348 = vcmp.eq.f32.partialorder %v338, inf
    %v349 = vsel %vm348, %v338, %v347
    %vm350 = vcmp.eq.f32.partialorder %v338, 0.0
    %v351 = vand.u32 %v338, 2147483648
    %v352 = vsel %vm350, %v351, %v349
    %v353 = vrsqrt.pop %v339
    %v354 = vmul.f32 %v339, %v353
    %vm355 = vcmp.eq.f32.partialorder %v339, inf
    %v356 = vsel %vm355, %v339, %v354
    %vm357 = vcmp.eq.f32.partialorder %v339, 0.0
    %v358 = vand.u32 %v339, 2147483648
    %v359 = vsel %vm357, %v358, %v356
    %v360 = vrsqrt.pop %v340
    %v361 = vmul.f32 %v340, %v360
    %vm362 = vcmp.eq.f32.partialorder %v340, inf
    %v363 = vsel %vm362, %v340, %v361
    %vm364 = vcmp.eq.f32.partialorder %v340, 0.0
    %v365 = vand.u32 %v340, 2147483648
    %v366 = vsel %vm364, %v365, %v363
    %v367 = vrsqrt.pop %v341
    %v368 = vmul.f32 %v341, %v367
    %vm369 = vcmp.eq.f32.partialorder %v341, inf
    %v370 = vsel %vm369, %v341, %v368
    %vm371 = vcmp.eq.f32.partialorder %v341, 0.0
    %v372 = vand.u32 %v341, 2147483648
    %v373 = vsel %vm371, %v372, %v370
    %v374 = vrsqrt.pop %v342
    %v375 = vmul.f32 %v342, %v374
    %vm376 = vcmp.eq.f32.partialorder %v342, inf
    %v377 = vsel %vm376, %v342, %v375
    %vm378 = vcmp.eq.f32.partialorder %v342, 0.0
    %v379 = vand.u32 %v342, 2147483648
    %v380 = vsel %vm378, %v379, %v377
    %v381 = vrsqrt.pop %v343
    %v382 = vmul.f32 %v343, %v381
    %vm383 = vcmp.eq.f32.partialorder %v343, inf
    %v384 = vsel %vm383, %v343, %v382
    %vm385 = vcmp.eq.f32.partialorder %v343, 0.0
    %v386 = vand.u32 %v343, 2147483648
    %v387 = vsel %vm385, %v386, %v384
    %v388 = vrsqrt.pop %v344
    %v389 = vmul.f32 %v344, %v388
    %vm390 = vcmp.eq.f32.partialorder %v344, inf
    %v391 = vsel %vm390, %v344, %v389
    %vm392 = vcmp.eq.f32.partialorder %v344, 0.0
    %v393 = vand.u32 %v344, 2147483648
    %v394 = vsel %vm392, %v393, %v391
    %v395 = vrsqrt.pop %v345
    %v396 = vmul.f32 %v345, %v395
    %vm397 = vcmp.eq.f32.partialorder %v345, inf
    %v398 = vsel %vm397, %v345, %v396
    %vm399 = vcmp.eq.f32.partialorder %v345, 0.0
    %v400 = vand.u32 %v345, 2147483648
    %v401 = vsel %vm399, %v400, %v398
    %vm402 = vcmp.lt.f32.partialorder %v202, 0.0
    %vm403 = vcmp.lt.f32.partialorder %v203, 0.0
    %vm404 = vcmp.lt.f32.partialorder %v204, 0.0
    %vm405 = vcmp.lt.f32.partialorder %v205, 0.0
    %vm406 = vcmp.lt.f32.partialorder %v206, 0.0
    %vm407 = vcmp.lt.f32.partialorder %v207, 0.0
    %vm408 = vcmp.lt.f32.partialorder %v208, 0.0
    %vm409 = vcmp.lt.f32.partialorder %v209, 0.0
    %v410 = vsub.f32 0.0, %v352
    %v411 = vsub.f32 0.0, %v359
    %v412 = vsub.f32 0.0, %v366
    %v413 = vsub.f32 0.0, %v373
    %v414 = vsub.f32 0.0, %v380
    %v415 = vsub.f32 0.0, %v387
    %v416 = vsub.f32 0.0, %v394
    %v417 = vsub.f32 0.0, %v401
    %v418 = vsel %vm402, %v410, %v352
    %v419 = vsel %vm403, %v411, %v359
    %v420 = vsel %vm404, %v412, %v366
    %v421 = vsel %vm405, %v413, %v373
    %v422 = vsel %vm406, %v414, %v380
    %v423 = vsel %vm407, %v415, %v387
    %v424 = vsel %vm408, %v416, %v394
    %v425 = vsel %vm409, %v417, %v401
    %v426 = vmul.f32 %v418, 0.042426407
    %v427 = vmul.f32 %v419, 0.042426407
    %v428 = vmul.f32 %v420, 0.042426407
    %v429 = vmul.f32 %v421, 0.042426407
    %v430 = vmul.f32 %v422, 0.042426407
    %v431 = vmul.f32 %v423, 0.042426407
    %v432 = vmul.f32 %v424, 0.042426407
    %v433 = vmul.f32 %v425, 0.042426407
    %v434 = vld [vmem:[#allocation3] sm:$0xff]
    %v435 = vld [vmem:[#allocation3 + $0x8] sm:$0xff]
    %v444 = vcombine.low %v426, %v427
    %v445 = vcombine.low %v428, %v429
    %v447 = vunpack.c.l.s4 1983009808
    %v448 = vunpack.c.0.s8 %v447
    %v449 = vlaneseq
    %v450 = vshrl.u32 %v449, 7
    %v451 = vsub.s32 %v448, %v450
    %v452 = vrot.slane %v444, %v451
    %v454 = vunpack.c.l.s4 1983009808
    %v455 = vunpack.c.0.s8 %v454
    %v456 = vlaneseq
    %v457 = vshrl.u32 %v456, 7
    %v458 = vsub.s32 %v455, %v457
    %v459 = vrot.slane %v445, %v458
    %v460 = vcombine.low %v452, %v459
    %v461 = vcombine.low %v430, %v431
    %v462 = vcombine.low %v432, %v433
    %v464 = vunpack.c.l.s4 1983009808
    %v465 = vunpack.c.0.s8 %v464
    %v466 = vlaneseq
    %v467 = vshrl.u32 %v466, 7
    %v468 = vsub.s32 %v465, %v467
    %v469 = vrot.slane %v461, %v468
    %v471 = vunpack.c.l.s4 1983009808
    %v472 = vunpack.c.0.s8 %v471
    %v473 = vlaneseq
    %v474 = vshrl.u32 %v473, 7
    %v475 = vsub.s32 %v472, %v474
    %v476 = vrot.slane %v462, %v475
    %v477 = vcombine.low %v469, %v476
    %v480 = vadd.f32 %v434, %v460
    %v481 = vadd.f32 %v435, %v477
    %482 = vst [vmem:[#allocation6] sm:$0xff] %v480
    %483 = vst [vmem:[#allocation6 + $0x8] sm:$0xff] %v481
    // Predicated region
    $region14: #{tpu_custom_call.1} parent=1 // pred_check
      _
    $region15: #{tpu_custom_call.1} parent=1 // pred_check_branch
      %485 = sbr.rel (0) target = $region17
    $region16: #{tpu_custom_call.1} parent=1 // pred_region
      %s487 = ssub.s32 256, 256
      %488 = vsyncadd [#allocation5], %s487
      %s490 = sshll.u32 [#allocation6], 4
      %s491 = int_to_ptr.vmem [resolvable:$true] %s490
      %493 = dma.vmem_to_hbm [thread:$0]  %s491, 256, %s2, [#allocation5]
    $region17: #{tpu_custom_call.1} parent=1 // pred_fallthru
      _
    // Predicated region
    $region18: #{tpu_custom_call.1} parent=1 // pred_check
      _
    $region19: #{tpu_custom_call.1} parent=1 // pred_check_branch
      %495 = sbr.rel (0) target = $region21
    $region20: #{tpu_custom_call.1} parent=1 // pred_region
      %496 = dma.done [#allocation5], 256
    $region21: #{tpu_custom_call.1} parent=1 // pred_fallthru
      _
    %497 = vsyncpa [#allocation4], 1
    %498 = vsyncpa [#allocation5], 1

</llo_original>
